<compile_context>
chip_gen: v5e
topology: v5e:2x2
jax: 0.10.0
libtpu: 0.0.40
codegen_flags: <defaults>
</compile_context>

<pallas_src>
import jax
import jax.numpy as jnp
from jax.experimental import pallas as pl
from jax.experimental.pallas import tpu as pltpu


def _round_up(x: int, m: int) -> int:
    return ((x + m - 1) // m) * m


def _mlp_kernel(x_ref, w0a_ref, w0b_ref, b0_ref, w1t_ref, b1_ref,
                w2d_ref, b2d_ref, o_ref):
    # x_ref: (2, TM) transposed input block -- batch along the 128-lane axis.
    x0 = x_ref[0:1, :]                                   # (1, TM)
    x1 = x_ref[1:2, :]                                   # (1, TM)

    # linear_0 (contraction dim = 2): VPU broadcast mul-add, fully lane-dense.
    h = w0a_ref[...] * x0 + w0b_ref[...] * x1 + b0_ref[...]          # (h1, TM)
    # sigmoid via a single EUP tanh (no f32 divide on the VALU path)
    h = 0.5 * jnp.tanh(0.5 * h) + 0.5

    # linear_1 on the MXU: (h2, h1) @ (h1, TM) with a lane-dense N dimension.
    h = jnp.dot(w1t_ref[...], h, preferred_element_type=jnp.float32) + b1_ref[...]
    h = jnp.maximum(h, 0.0)                                           # ReLU

    # linear_2 + softmax over 2 classes, folded:
    #   softmax([z0, z1]) == [sigmoid(z0 - z1), sigmoid(z1 - z0)]
    # logit difference = VPU multiply + sublane (XLU) reduce, no N=1 MXU matvec.
    d = jnp.sum(h * w2d_ref[...], axis=0, keepdims=True) + b2d_ref[...]  # (1, TM)

    # Exact sigmoid for BOTH classes (keeps full relative precision of the small
    # class; exp overflow saturates cleanly to 0/1, no NaNs).
    o_ref[0:1, :] = 1.0 / (1.0 + jnp.exp(-d))
    o_ref[1:2, :] = 1.0 / (1.0 + jnp.exp(d))


def network2_sig_relu_forward(x, params, *, block_cols=16384):
    """x: (N, 2) float32; params: dict of (W, b) for the three linear layers.

    Weights are stored as (in_features, out_features); biases may be (1, out)
    or (out,).  Returns softmax probabilities of shape (N, 2).
    """
    w0, b0 = params["w0"], params["b0"]
    w1, b1 = params["w1"], params["b1"]
    w2, b2 = params["w2"], params["b2"]

    h1 = w0.shape[1]
    h2 = w1.shape[1]
    n = x.shape[0]

    # --- call-invariant parameter preprocessing (transposed, column form) ---
    w0a = jnp.reshape(w0[0, :], (h1, 1)).astype(jnp.float32)   # w0 row 0 as column
    w0b = jnp.reshape(w0[1, :], (h1, 1)).astype(jnp.float32)   # w0 row 1 as column
    b0c = jnp.reshape(b0, (h1, 1)).astype(jnp.float32)
    w1t = jnp.transpose(w1).astype(jnp.float32)                # (h2, h1)
    b1c = jnp.reshape(b1, (h2, 1)).astype(jnp.float32)
    w2dc = jnp.reshape(w2[:, 0] - w2[:, 1], (h2, 1)).astype(jnp.float32)
    b2f = jnp.reshape(b2, (-1,)).astype(jnp.float32)
    b2d = jnp.reshape(b2f[0] - b2f[1], (1, 1))                 # (1, 1)

    # --- lane-dense transposed input: batch along the 128-lane axis ---
    xt = jnp.transpose(x.astype(jnp.float32))                  # (2, N)

    n_lane = _round_up(max(n, 1), 128)
    tm = min(block_cols, n_lane)
    # v7x megacore: prefer >= 2 grid steps when there is enough work.
    if n_lane >= 4096 and (n_lane + tm - 1) // tm < 2:
        tm = _round_up((n_lane + 1) // 2, 128)
    n_pad = _round_up(n, tm)
    if n_pad != n:
        # only for ragged N; XLA fuses this with the transpose above.
        xt = jnp.pad(xt, ((0, 0), (0, n_pad - n)))

    grid = (n_pad // tm,)

    def const(shape):
        return pl.BlockSpec(shape, lambda i, _s=len(shape): (0,) * _s)

    out_t = pl.pallas_call(
        _mlp_kernel,
        out_shape=jax.ShapeDtypeStruct((2, n_pad), jnp.float32),
        grid=grid,
        in_specs=[
            pl.BlockSpec((2, tm), lambda i: (0, i)),   # x^T: tiled over batch lanes
            const(w0a.shape),                          # weights/biases: VMEM-resident
            const(w0b.shape),
            const(b0c.shape),
            const(w1t.shape),
            const(b1c.shape),
            const(w2dc.shape),
            const(b2d.shape),
        ],
        out_specs=pl.BlockSpec((2, tm), lambda i: (0, i)),
        compiler_params=pltpu.CompilerParams(
            dimension_semantics=("parallel",),         # shard batch tiles on v7x's 2 TCs
        ),
    )(xt, w0a, w0b, b0c, w1t, b1c, w2dc, b2d)

    # back to (N, 2); the slice + transpose fuse into a single cheap XLA op.
    return jnp.transpose(out_t[:, :n])


def init_params(key, hidden_size_1, hidden_size_2):
    """Deterministic synthetic init mirroring LinearLayer(in, out) shapes:
    weight (in, out), bias (1, out) -- uniform like the torch default."""
    def linear(k, fan_in, fan_out):
        kw, kb = jax.random.split(k)
        bound = 1.0 / jnp.sqrt(float(fan_in))
        w = jax.random.uniform(kw, (fan_in, fan_out), jnp.float32, -bound, bound)
        b = jax.random.uniform(kb, (1, fan_out), jnp.float32, -bound, bound)
        return w, b

    k0, k1, k2 = jax.random.split(key, 3)
    w0, b0 = linear(k0, 2, hidden_size_1)
    w1, b1 = linear(k1, hidden_size_1, hidden_size_2)
    w2, b2 = linear(k2, hidden_size_2, 2)
    return {"w0": w0, "b0": b0, "w1": w1, "b1": b1, "w2": w2, "b2": b2}


def _reference_forward(x, p):
    h = jax.nn.sigmoid(x @ p["w0"] + jnp.reshape(p["b0"], (1, -1)))
    h = jax.nn.relu(h @ p["w1"] + jnp.reshape(p["b1"], (1, -1)))
    return jax.nn.softmax(h @ p["w2"] + jnp.reshape(p["b2"], (1, -1)), axis=-1)


if __name__ == "__main__":
    key = jax.random.PRNGKey(0)
    k_param, k_x = jax.random.split(key)

    hidden_size_1, hidden_size_2 = 32, 32
    batch = 8

    params = init_params(k_param, hidden_size_1, hidden_size_2)
    x = jax.random.normal(k_x, (batch, 2), jnp.float32)

    out = network2_sig_relu_forward(x, params)
    out = jax.block_until_ready(out)

    ref = _reference_forward(x, params)
    assert out.shape == (batch, 2)
    assert jnp.allclose(out, ref, atol=1e-5, rtol=1e-5)
    # rows of a softmax sum to 1
    assert jnp.allclose(jnp.sum(out, axis=-1), jnp.ones((batch,)), atol=1e-5)

    print("KERNEL_OK")
</pallas_src>

<mosaic_0001>
module attributes {stable_mosaic.version = 11 : i64} {
  func.func @_mlp_kernel(%arg0: i32, %arg1: memref<2x128xf32, #tpu.memory_space<vmem>>, %arg2: memref<32x1xf32, #tpu.memory_space<vmem>>, %arg3: memref<32x1xf32, #tpu.memory_space<vmem>>, %arg4: memref<32x1xf32, #tpu.memory_space<vmem>>, %arg5: memref<32x32xf32, #tpu.memory_space<vmem>>, %arg6: memref<32x1xf32, #tpu.memory_space<vmem>>, %arg7: memref<32x1xf32, #tpu.memory_space<vmem>>, %arg8: memref<1x1xf32, #tpu.memory_space<vmem>>, %arg9: memref<2x128xf32, #tpu.memory_space<vmem>>) attributes {dimension_semantics = [#tpu.dimension_semantics<parallel>], iteration_bounds = array<i64: 1>, scalar_prefetch = 0 : i64, scratch_operands = 0 : i64, tpu.core_type = #tpu.core_type<tc>, window_params = [{transform_indices = @transform_0, window_bounds = array<i64: 2, 128>}, {pipeline_mode = #tpu.pipeline_mode<synchronous>, transform_indices = @transform_1, window_bounds = array<i64: 32, 1>}, {pipeline_mode = #tpu.pipeline_mode<synchronous>, transform_indices = @transform_2, window_bounds = array<i64: 32, 1>}, {pipeline_mode = #tpu.pipeline_mode<synchronous>, transform_indices = @transform_3, window_bounds = array<i64: 32, 1>}, {pipeline_mode = #tpu.pipeline_mode<synchronous>, transform_indices = @transform_4, window_bounds = array<i64: 32, 32>}, {pipeline_mode = #tpu.pipeline_mode<synchronous>, transform_indices = @transform_5, window_bounds = array<i64: 32, 1>}, {pipeline_mode = #tpu.pipeline_mode<synchronous>, transform_indices = @transform_6, window_bounds = array<i64: 32, 1>}, {pipeline_mode = #tpu.pipeline_mode<synchronous>, transform_indices = @transform_7, window_bounds = array<i64: 1, 1>}, {transform_indices = @transform_8, window_bounds = array<i64: 2, 128>}]} {
    %c0 = arith.constant 0 : index
    %c0_0 = arith.constant 0 : index
    %0 = vector.load %arg1[%c0, %c0_0] : memref<2x128xf32, #tpu.memory_space<vmem>>, vector<1x128xf32>
    %c1 = arith.constant 1 : index
    %c0_1 = arith.constant 0 : index
    %1 = vector.load %arg1[%c1, %c0_1] : memref<2x128xf32, #tpu.memory_space<vmem>>, vector<1x128xf32>
    %c0_2 = arith.constant 0 : index
    %c0_3 = arith.constant 0 : index
    %2 = vector.load %arg2[%c0_2, %c0_3] : memref<32x1xf32, #tpu.memory_space<vmem>>, vector<32x1xf32>
    %3 = vector.broadcast %2 : vector<32x1xf32> to vector<32x128xf32>
    %4 = vector.broadcast %0 : vector<1x128xf32> to vector<32x128xf32>
    %5 = arith.mulf %3, %4 : vector<32x128xf32>
    %c0_4 = arith.constant 0 : index
    %c0_5 = arith.constant 0 : index
    %6 = vector.load %arg3[%c0_4, %c0_5] : memref<32x1xf32, #tpu.memory_space<vmem>>, vector<32x1xf32>
    %7 = vector.broadcast %6 : vector<32x1xf32> to vector<32x128xf32>
    %8 = vector.broadcast %1 : vector<1x128xf32> to vector<32x128xf32>
    %9 = arith.mulf %7, %8 : vector<32x128xf32>
    %10 = arith.addf %5, %9 : vector<32x128xf32>
    %c0_6 = arith.constant 0 : index
    %c0_7 = arith.constant 0 : index
    %11 = vector.load %arg4[%c0_6, %c0_7] : memref<32x1xf32, #tpu.memory_space<vmem>>, vector<32x1xf32>
    %12 = vector.broadcast %11 : vector<32x1xf32> to vector<32x128xf32>
    %13 = arith.addf %10, %12 : vector<32x128xf32>
    %cst = arith.constant 5.000000e-01 : f32
    %14 = vector.broadcast %cst : f32 to vector<32x128xf32>
    %15 = arith.mulf %14, %13 : vector<32x128xf32>
    %16 = math.tanh %15 : vector<32x128xf32>
    %cst_8 = arith.constant 5.000000e-01 : f32
    %17 = vector.broadcast %cst_8 : f32 to vector<32x128xf32>
    %18 = arith.mulf %17, %16 : vector<32x128xf32>
    %cst_9 = arith.constant 5.000000e-01 : f32
    %19 = vector.broadcast %cst_9 : f32 to vector<32x128xf32>
    %20 = arith.addf %18, %19 : vector<32x128xf32>
    %c0_10 = arith.constant 0 : index
    %c0_11 = arith.constant 0 : index
    %21 = vector.load %arg5[%c0_10, %c0_11] : memref<32x32xf32, #tpu.memory_space<vmem>>, vector<32x32xf32>
    %cst_12 = arith.constant dense<0.000000e+00> : vector<32x128xf32>
    %22 = tpu.matmul %21, %20, %cst_12 {dimension_numbers = #tpu.dot_dimension_numbers<[1], [0], [0], [1], [0, 0, 1, 1], [], []>} : vector<32x32xf32>, vector<32x128xf32>, vector<32x128xf32> -> vector<32x128xf32>
    %c0_13 = arith.constant 0 : index
    %c0_14 = arith.constant 0 : index
    %23 = vector.load %arg6[%c0_13, %c0_14] : memref<32x1xf32, #tpu.memory_space<vmem>>, vector<32x1xf32>
    %24 = vector.broadcast %23 : vector<32x1xf32> to vector<32x128xf32>
    %25 = arith.addf %22, %24 : vector<32x128xf32>
    %cst_15 = arith.constant 0.000000e+00 : f32
    %26 = vector.broadcast %cst_15 : f32 to vector<32x128xf32>
    %27 = arith.maximumf %25, %26 : vector<32x128xf32>
    %c0_16 = arith.constant 0 : index
    %c0_17 = arith.constant 0 : index
    %28 = vector.load %arg7[%c0_16, %c0_17] : memref<32x1xf32, #tpu.memory_space<vmem>>, vector<32x1xf32>
    %29 = vector.broadcast %28 : vector<32x1xf32> to vector<32x128xf32>
    %30 = arith.mulf %27, %29 : vector<32x128xf32>
    %cst_18 = arith.constant dense<0.000000e+00> : vector<128xf32>
    %31 = vector.multi_reduction <add>, %30, %cst_18 [0] : vector<32x128xf32> to vector<128xf32>
    %32 = vector.shape_cast %31 : vector<128xf32> to vector<1x128xf32>
    %c0_19 = arith.constant 0 : index
    %c0_20 = arith.constant 0 : index
    %33 = vector.load %arg8[%c0_19, %c0_20] : memref<1x1xf32, #tpu.memory_space<vmem>>, vector<1x1xf32>
    %34 = vector.broadcast %33 : vector<1x1xf32> to vector<1x128xf32>
    %35 = arith.addf %32, %34 : vector<1x128xf32>
    %cst_21 = arith.constant 0.000000e+00 : f32
    %36 = vector.broadcast %cst_21 : f32 to vector<1x128xf32>
    %37 = arith.subf %36, %35 : vector<1x128xf32>
    %38 = math.exp %37 : vector<1x128xf32>
    %cst_22 = arith.constant 1.000000e+00 : f32
    %39 = vector.broadcast %cst_22 : f32 to vector<1x128xf32>
    %40 = arith.addf %39, %38 : vector<1x128xf32>
    %cst_23 = arith.constant 1.000000e+00 : f32
    %41 = vector.broadcast %cst_23 : f32 to vector<1x128xf32>
    %42 = arith.divf %41, %40 : vector<1x128xf32>
    %c0_24 = arith.constant 0 : index
    %c0_25 = arith.constant 0 : index
    %43 = vector.load %arg9[%c0_24, %c0_25] : memref<2x128xf32, #tpu.memory_space<vmem>>, vector<1x128xf32>
    tpu.vector_store %arg9[%c0_24, %c0_25], %42 {strides = array<i32>} : memref<2x128xf32, #tpu.memory_space<vmem>>, vector<1x128xf32>,
    %44 = math.exp %35 : vector<1x128xf32>
    %cst_26 = arith.constant 1.000000e+00 : f32
    %45 = vector.broadcast %cst_26 : f32 to vector<1x128xf32>
    %46 = arith.addf %45, %44 : vector<1x128xf32>
    %cst_27 = arith.constant 1.000000e+00 : f32
    %47 = vector.broadcast %cst_27 : f32 to vector<1x128xf32>
    %48 = arith.divf %47, %46 : vector<1x128xf32>
    %c1_28 = arith.constant 1 : index
    %c0_29 = arith.constant 0 : index
    %49 = vector.load %arg9[%c1_28, %c0_29] : memref<2x128xf32, #tpu.memory_space<vmem>>, vector<1x128xf32>
    tpu.vector_store %arg9[%c1_28, %c0_29], %48 {strides = array<i32>} : memref<2x128xf32, #tpu.memory_space<vmem>>, vector<1x128xf32>,
    return
  }
  func.func @transform_0(%arg0: i32) -> (i32, i32) {
    %c0_i32 = arith.constant 0 : i32
    %c0_i32_0 = arith.constant 0 : i32
    return %c0_i32, %arg0 : i32, i32
  }
  func.func @transform_1(%arg0: i32) -> (i32, i32) {
    %c0_i32 = arith.constant 0 : i32
    %c0_i32_0 = arith.constant 0 : i32
    %c0_i32_1 = arith.constant 0 : i32
    return %c0_i32, %c0_i32_0 : i32, i32
  }
  func.func @transform_2(%arg0: i32) -> (i32, i32) {
    %c0_i32 = arith.constant 0 : i32
    %c0_i32_0 = arith.constant 0 : i32
    %c0_i32_1 = arith.constant 0 : i32
    return %c0_i32, %c0_i32_0 : i32, i32
  }
  func.func @transform_3(%arg0: i32) -> (i32, i32) {
    %c0_i32 = arith.constant 0 : i32
    %c0_i32_0 = arith.constant 0 : i32
    %c0_i32_1 = arith.constant 0 : i32
    return %c0_i32, %c0_i32_0 : i32, i32
  }
  func.func @transform_4(%arg0: i32) -> (i32, i32) {
    %c0_i32 = arith.constant 0 : i32
    %c0_i32_0 = arith.constant 0 : i32
    %c0_i32_1 = arith.constant 0 : i32
    return %c0_i32, %c0_i32_0 : i32, i32
  }
  func.func @transform_5(%arg0: i32) -> (i32, i32) {
    %c0_i32 = arith.constant 0 : i32
    %c0_i32_0 = arith.constant 0 : i32
    %c0_i32_1 = arith.constant 0 : i32
    return %c0_i32, %c0_i32_0 : i32, i32
  }
  func.func @transform_6(%arg0: i32) -> (i32, i32) {
    %c0_i32 = arith.constant 0 : i32
    %c0_i32_0 = arith.constant 0 : i32
    %c0_i32_1 = arith.constant 0 : i32
    return %c0_i32, %c0_i32_0 : i32, i32
  }
  func.func @transform_7(%arg0: i32) -> (i32, i32) {
    %c0_i32 = arith.constant 0 : i32
    %c0_i32_0 = arith.constant 0 : i32
    %c0_i32_1 = arith.constant 0 : i32
    return %c0_i32, %c0_i32_0 : i32, i32
  }
  func.func @transform_8(%arg0: i32) -> (i32, i32) {
    %c0_i32 = arith.constant 0 : i32
    %c0_i32_0 = arith.constant 0 : i32
    return %c0_i32, %arg0 : i32, i32
  }
}

</mosaic_0001>

<llo_original>
// kernel: tpu_custom_call.1
$region0: #{tpu_custom_call.1}
  #allocation0 [shape = 'u32[]', space=smem, size = 0x4, offset = 0x4, fixed_abs, tag = 'smem constant byte address 0x4 - core index']
  #allocation1 [shape = 'u32[72,128]{1,0:T(1,128)}', space=vmem, size = 0x9000, scoped, tag = 'internal scratch']
  #allocation2 [shape = 'f32[1,1]{1,0:T(1,128)S(1)}', space=vmem, size = 0x200, scoped, tag = 'scoped memory for tpu_custom_call.1']
  %s0 = inlined_call_operand.vmem [shape: f32[2,128], index: 0, kind: input, shape index: {}]
  %s1 = inlined_call_operand.vmem [shape: f32[32,1], index: 1, kind: input, shape index: {}]
  %s2 = inlined_call_operand.vmem [shape: f32[32,1], index: 2, kind: input, shape index: {}]
  %s3 = inlined_call_operand.vmem [shape: f32[32,1], index: 3, kind: input, shape index: {}]
  %s4 = inlined_call_operand.vmem [shape: f32[32,32], index: 4, kind: input, shape index: {}]
  %s5 = inlined_call_operand.vmem [shape: f32[32,1], index: 5, kind: input, shape index: {}]
  %s6 = inlined_call_operand.vmem [shape: f32[32,1], index: 6, kind: input, shape index: {}]
  %s7 = inlined_call_operand.<no memory space> [shape: f32[1,1], index: 7, kind: input, shape index: {}]
  %s8 = inlined_call_operand.hbm [shape: f32[2,128], index: 8, kind: output, shape index: {}]
  %s9 = sld [smem:[#allocation0]]
  $region42: #{tpu_custom_call.1} parent=0
    _
  %s11 = ssub.s32 1, %s9
  %s12 = scalar_select 0, %s11, %s9
  %v13 = vstv %s7
  %14 = vst [vmem:[#allocation2] sm:$0x1] %v13
  $region1: #{tpu_custom_call.1} parent=0
    #allocation3 [shape = 'u8[1024]{0}', space=vmem, size = 0x400, scoped, tag = 'output window, operand 0, single buffered']
    #allocation4 [shape = 's32[1]{0}', space=sflag, size = 0x4, scoped, tag = 'scoped memory for tpu_custom_call.1']
    %15 = vsyncpa [#allocation4], 0
    // Predicated region
    $region2: #{tpu_custom_call.1} parent=1 // pred_check
      _
    $region3: #{tpu_custom_call.1} parent=1 // pred_check_branch
      %17 = sbr.rel (0) target = $region5
    $region4: #{tpu_custom_call.1} parent=1 // pred_region
      _
    $region5: #{tpu_custom_call.1} parent=1 // pred_fallthru
      _
    // Predicated region
    $region6: #{tpu_custom_call.1} parent=1 // pred_check
      _
    $region7: #{tpu_custom_call.1} parent=1 // pred_check_branch
      %19 = sbr.rel (0) target = $region9
    $region8: #{tpu_custom_call.1} parent=1 // pred_region
      _
    $region9: #{tpu_custom_call.1} parent=1 // pred_fallthru
      _
    // Predicated region
    $region10: #{tpu_custom_call.1} parent=1 // pred_check
      _
    $region11: #{tpu_custom_call.1} parent=1 // pred_check_branch
      %21 = sbr.rel (0) target = $region13
    $region12: #{tpu_custom_call.1} parent=1 // pred_region
      _
    $region13: #{tpu_custom_call.1} parent=1 // pred_fallthru
      _
    // Predicated region
    $region14: #{tpu_custom_call.1} parent=1 // pred_check
      _
    $region15: #{tpu_custom_call.1} parent=1 // pred_check_branch
      %23 = sbr.rel (0) target = $region17
    $region16: #{tpu_custom_call.1} parent=1 // pred_region
      _
    $region17: #{tpu_custom_call.1} parent=1 // pred_fallthru
      _
    // Predicated region
    $region18: #{tpu_custom_call.1} parent=1 // pred_check
      _
    $region19: #{tpu_custom_call.1} parent=1 // pred_check_branch
      %25 = sbr.rel (0) target = $region21
    $region20: #{tpu_custom_call.1} parent=1 // pred_region
      _
    $region21: #{tpu_custom_call.1} parent=1 // pred_fallthru
      _
    // Predicated region
    $region22: #{tpu_custom_call.1} parent=1 // pred_check
      _
    $region23: #{tpu_custom_call.1} parent=1 // pred_check_branch
      %27 = sbr.rel (0) target = $region25
    $region24: #{tpu_custom_call.1} parent=1 // pred_region
      _
    $region25: #{tpu_custom_call.1} parent=1 // pred_fallthru
      _
    // Predicated region
    $region26: #{tpu_custom_call.1} parent=1 // pred_check
      _
    $region27: #{tpu_custom_call.1} parent=1 // pred_check_branch
      %29 = sbr.rel (0) target = $region29
    $region28: #{tpu_custom_call.1} parent=1 // pred_region
      _
    $region29: #{tpu_custom_call.1} parent=1 // pred_fallthru
      _
    // Predicated region
    $region30: #{tpu_custom_call.1} parent=1 // pred_check
      _
    $region31: #{tpu_custom_call.1} parent=1 // pred_check_branch
      %31 = sbr.rel (0) target = $region33
    $region32: #{tpu_custom_call.1} parent=1 // pred_region
      _
    $region33: #{tpu_custom_call.1} parent=1 // pred_fallthru
      _
    %v32 = vld [vmem:[%s0] sm:$0x1]
    %v33 = vld [vmem:[%s0 + $0x1] sm:$0x1]
    %v34 = vld [vmem:[%s1] sm:$0xff]
    %v35 = vld [vmem:[%s1 + $0x8] sm:$0xff]
    %v36 = vld [vmem:[%s1 + $0x10] sm:$0xff]
    %v37 = vld [vmem:[%s1 + $0x18] sm:$0xff]
    %39 = vset.pattern.permute.xlu0 0
    %40 = vperm.xlu0 %39, %v34
    %v41 = vpop.permute.xlu0 %40
    %44 = vset.pattern.permute.xlu0 0
    %45 = vperm.xlu0 %44, %v35
    %v46 = vpop.permute.xlu0 %45
    %49 = vset.pattern.permute.xlu0 0
    %50 = vperm.xlu0 %49, %v36
    %v51 = vpop.permute.xlu0 %50
    %54 = vset.pattern.permute.xlu0 0
    %55 = vperm.xlu0 %54, %v37
    %v56 = vpop.permute.xlu0 %55
    %v58 = vperm.slane %v32, 0
    %v59 = vmul.f32 %v41, %v58
    %v60 = vmul.f32 %v46, %v58
    %v61 = vmul.f32 %v51, %v58
    %v62 = vmul.f32 %v56, %v58
    %v63 = vld [vmem:[%s2] sm:$0xff]
    %v64 = vld [vmem:[%s2 + $0x8] sm:$0xff]
    %v65 = vld [vmem:[%s2 + $0x10] sm:$0xff]
    %v66 = vld [vmem:[%s2 + $0x18] sm:$0xff]
    %68 = vset.pattern.permute.xlu0 0
    %69 = vperm.xlu0 %68, %v63
    %v70 = vpop.permute.xlu0 %69
    %73 = vset.pattern.permute.xlu0 0
    %74 = vperm.xlu0 %73, %v64
    %v75 = vpop.permute.xlu0 %74
    %78 = vset.pattern.permute.xlu0 0
    %79 = vperm.xlu0 %78, %v65
    %v80 = vpop.permute.xlu0 %79
    %83 = vset.pattern.permute.xlu0 0
    %84 = vperm.xlu0 %83, %v66
    %v85 = vpop.permute.xlu0 %84
    %v87 = vperm.slane %v33, 0
    %v88 = vmul.f32 %v70, %v87
    %v89 = vmul.f32 %v75, %v87
    %v90 = vmul.f32 %v80, %v87
    %v91 = vmul.f32 %v85, %v87
    %v92 = vadd.f32 %v59, %v88
    %v93 = vadd.f32 %v60, %v89
    %v94 = vadd.f32 %v61, %v90
    %v95 = vadd.f32 %v62, %v91
    %v96 = vld [vmem:[%s3] sm:$0xff]
    %v97 = vld [vmem:[%s3 + $0x8] sm:$0xff]
    %v98 = vld [vmem:[%s3 + $0x10] sm:$0xff]
    %v99 = vld [vmem:[%s3 + $0x18] sm:$0xff]
    %101 = vset.pattern.permute.xlu0 0
    %102 = vperm.xlu0 %101, %v96
    %v103 = vpop.permute.xlu0 %102
    %106 = vset.pattern.permute.xlu0 0
    %107 = vperm.xlu0 %106, %v97
    %v108 = vpop.permute.xlu0 %107
    %111 = vset.pattern.permute.xlu0 0
    %112 = vperm.xlu0 %111, %v98
    %v113 = vpop.permute.xlu0 %112
    %116 = vset.pattern.permute.xlu0 0
    %117 = vperm.xlu0 %116, %v99
    %v118 = vpop.permute.xlu0 %117
    %v120 = vadd.f32 %v92, %v103
    %v121 = vadd.f32 %v93, %v108
    %v122 = vadd.f32 %v94, %v113
    %v123 = vadd.f32 %v95, %v118
    %v124 = vmul.f32 %v120, 0.5
    %v125 = vmul.f32 %v121, 0.5
    %v126 = vmul.f32 %v122, 0.5
    %v127 = vmul.f32 %v123, 0.5
    %v128 = vtanh.pop %v124
    %v129 = vtanh.pop %v125
    %v130 = vtanh.pop %v126
    %v131 = vtanh.pop %v127
    %v132 = vmul.f32 %v128, 0.5
    %v133 = vmul.f32 %v129, 0.5
    %v134 = vmul.f32 %v130, 0.5
    %v135 = vmul.f32 %v131, 0.5
    %v136 = vadd.f32 %v132, 0.5
    %v137 = vadd.f32 %v133, 0.5
    %v138 = vadd.f32 %v134, 0.5
    %v139 = vadd.f32 %v135, 0.5
    %v140 = vld [vmem:[%s4] sm:$0xff]
    %v141 = vld [vmem:[%s4 + $0x8] sm:$0xff]
    %v142 = vld [vmem:[%s4 + $0x10] sm:$0xff]
    %v143 = vld [vmem:[%s4 + $0x18] sm:$0xff]
    %v144 = vld [vmem:[%s5] sm:$0xff]
    %v145 = vld [vmem:[%s5 + $0x8] sm:$0xff]
    %v146 = vld [vmem:[%s5 + $0x10] sm:$0xff]
    %v147 = vld [vmem:[%s5 + $0x18] sm:$0xff]
    %149 = vset.pattern.permute.xlu0 0
    %150 = vperm.xlu0 %149, %v144
    %v151 = vpop.permute.xlu0 %150
    %154 = vset.pattern.permute.xlu0 0
    %155 = vperm.xlu0 %154, %v145
    %v156 = vpop.permute.xlu0 %155
    %159 = vset.pattern.permute.xlu0 0
    %160 = vperm.xlu0 %159, %v146
    %v161 = vpop.permute.xlu0 %160
    %164 = vset.pattern.permute.xlu0 0
    %165 = vperm.xlu0 %164, %v147
    %v166 = vpop.permute.xlu0 %165
    %vm168 = vcmask 261120
    %v170 = vsel %vm168, %v140, 0
    %v173 = vsel %vm168, %v141, 0
    %v176 = vsel %vm168, %v142, 0
    %v179 = vsel %vm168, %v143, 0
    %181 = vmatpush.msra.mxu0 0.0
    %182 = vmatpush.msra.mxu0 0.0
    %183 = vmatpush.msra.mxu0 0.0
    %184 = vmatpush.msra.mxu0 0.0
    %185 = vmatpush.msra.mxu0 0.0
    %186 = vmatpush.msra.mxu0 0.0
    %187 = vmatpush.msra.mxu0 0.0
    %188 = vmatpush.msra.mxu0 0.0
    %189 = vmatpush.msra.mxu0 0.0
    %190 = vmatpush.msra.mxu0 0.0
    %191 = vmatpush.msra.mxu0 0.0
    %192 = vmatpush.msra.mxu0 0.0
    %193 = vmatpush.msra.mxu0 %v139
    %194 = vmatpush.msra.mxu0 %v138
    %195 = vmatpush.msra.mxu0 %v137
    %196 = vmatpush.msra.mxu0 %v136
    %197 = vmatmul.f32.gmra.mxu0 %v170
    %v198 = vpop.f32.mrf.mxu0
    %v199 = vadd.f32 %v151, %v198
    %200 = vmatmul.f32.gmra.mxu0 %v173
    %v201 = vpop.f32.mrf.mxu0
    %v202 = vadd.f32 %v156, %v201
    %203 = vmatmul.f32.gmra.mxu0 %v176
    %v204 = vpop.f32.mrf.mxu0
    %v205 = vadd.f32 %v161, %v204
    %206 = vmatmul.f32.gmra.mxu0 %v179
    %v207 = vpop.f32.mrf.mxu0
    %v208 = vadd.f32 %v166, %v207
    %209 = vdwg.mxu0
    %v210 = vmax.f32 %v199, 0.0
    %v211 = vmax.f32 %v202, 0.0
    %v212 = vmax.f32 %v205, 0.0
    %v213 = vmax.f32 %v208, 0.0
    %v214 = vld [vmem:[%s6] sm:$0xff]
    %v215 = vld [vmem:[%s6 + $0x8] sm:$0xff]
    %v216 = vld [vmem:[%s6 + $0x10] sm:$0xff]
    %v217 = vld [vmem:[%s6 + $0x18] sm:$0xff]
    %219 = vset.pattern.permute.xlu0 0
    %220 = vperm.xlu0 %219, %v214
    %v221 = vpop.permute.xlu0 %220
    %224 = vset.pattern.permute.xlu0 0
    %225 = vperm.xlu0 %224, %v215
    %v226 = vpop.permute.xlu0 %225
    %229 = vset.pattern.permute.xlu0 0
    %230 = vperm.xlu0 %229, %v216
    %v231 = vpop.permute.xlu0 %230
    %234 = vset.pattern.permute.xlu0 0
    %235 = vperm.xlu0 %234, %v217
    %v236 = vpop.permute.xlu0 %235
    %v238 = vmul.f32 %v210, %v221
    %v239 = vmul.f32 %v211, %v226
    %v240 = vmul.f32 %v212, %v231
    %v241 = vmul.f32 %v213, %v236
    %v242 = vadd.f32 %v238, %v239
    %v243 = vadd.f32 %v242, %v240
    %v244 = vadd.f32 %v243, %v241
    %v245 = vrot.slane %v244, 4
    %v246 = vadd.f32 %v244, %v245
    %v247 = vrot.slane %v246, 2
    %v248 = vadd.f32 %v246, %v247
    %v249 = vrot.slane %v248, 1
    %v250 = vadd.f32 %v248, %v249
    %v251 = vld [vmem:[#allocation2] sm:$0x1]
    %253 = vset.pattern.permute.xlu0 0
    %254 = vperm.xlu0 %253, %v251
    %v255 = vpop.permute.xlu0 %254
    %v257 = vperm.slane %v255, 0
    %v258 = vadd.f32 %v250, %v257
    %v259 = vsub.f32 0.0, %v258
    %v260 = vmul.f32 %v259, 1.442695
    %v261 = vpow.pop %v260
    %v262 = vadd.f32 %v261, 1.0
    %v263 = vrcp.pop %v262
    %v264 = vmul.f32 %v262, %v263
    %v265 = vsub.f32 1.0, %v264
    %v266 = vmul.f32 %v263, %v265
    %v267 = vadd.f32 %v263, %v266
    %vm268 = vweird.f32 %v262
    %vm269 = vweird.f32 %v263
    %vm270 = vmor %vm268, %vm269
    %v271 = vsel %vm270, %v263, %v267
    %v272 = vand.u32 2147483647, %v262
    %vm273 = vcmp.eq.f32.partialorder %v272, 8.507059e+37
    %v274 = vand.u32 %v262, 2147483648
    %v275 = vor.u32 1.1754944e-38, %v274
    %v276 = vsel %vm273, %v275, %v271
    %v277 = vmul.f32 1.0, %v276
    %278 = vst [vmem:[#allocation3] sm:$0x1] %v277
    %v279 = vmul.f32 %v258, 1.442695
    %v280 = vpow.pop %v279
    %v281 = vadd.f32 %v280, 1.0
    %v282 = vrcp.pop %v281
    %v283 = vmul.f32 %v281, %v282
    %v284 = vsub.f32 1.0, %v283
    %v285 = vmul.f32 %v282, %v284
    %v286 = vadd.f32 %v282, %v285
    %vm287 = vweird.f32 %v281
    %vm288 = vweird.f32 %v282
    %vm289 = vmor %vm287, %vm288
    %v290 = vsel %vm289, %v282, %v286
    %v291 = vand.u32 2147483647, %v281
    %vm292 = vcmp.eq.f32.partialorder %v291, 8.507059e+37
    %v293 = vand.u32 %v281, 2147483648
    %v294 = vor.u32 1.1754944e-38, %v293
    %v295 = vsel %vm292, %v294, %v290
    %v296 = vmul.f32 1.0, %v295
    %297 = vst [vmem:[#allocation3 + $0x1] sm:$0x1] %v296
    // Predicated region
    $region34: #{tpu_custom_call.1} parent=1 // pred_check
      _
    $region35: #{tpu_custom_call.1} parent=1 // pred_check_branch
      %299 = sbr.rel (0) target = $region37
    $region36: #{tpu_custom_call.1} parent=1 // pred_region
      %301 = vsyncadd [#allocation4], 0
      %s303 = sshll.u32 [#allocation3], 4
      %s304 = int_to_ptr.vmem [resolvable:$true] %s303
      %s305 = sshll.u32 %s8, 4
      %s306 = int_to_ptr.hbm [resolvable:$true] %s305
      %308 = dma.vmem_to_hbm [thread:$0]  %s304, 32, %s306, [#allocation4]
    $region37: #{tpu_custom_call.1} parent=1 // pred_fallthru
      _
    // Predicated region
    $region38: #{tpu_custom_call.1} parent=1 // pred_check
      _
    $region39: #{tpu_custom_call.1} parent=1 // pred_check_branch
      %310 = sbr.rel (0) target = $region41
    $region40: #{tpu_custom_call.1} parent=1 // pred_region
      %312 = dma.done [#allocation4], 32
    $region41: #{tpu_custom_call.1} parent=1 // pred_fallthru
      _
    %313 = vsyncpa [#allocation4], 1

</llo_original>
